<compile_context>
chip_gen: v7x
topology: tpu7x:2x2x1
jax: 0.10.0
libtpu: 0.0.40
codegen_flags: <defaults>
</compile_context>

<pallas_src>
import functools

import jax
import jax.numpy as jnp
from jax.experimental import pallas as pl
from jax.experimental.pallas import tpu as pltpu


# --------------------------------------------------------------------------- #
# Kernel
# --------------------------------------------------------------------------- #
def _ffn_kernel(*refs, add_residual, explicit_residual, compute_dtype):
    """One row tile: out = relu(x @ W1 + b1) @ W2 + b2 [+ residual]."""
    if explicit_residual:
        x_ref, w1_ref, b1_ref, w2_ref, b2_ref, res_ref, o_ref = refs
    else:
        x_ref, w1_ref, b1_ref, w2_ref, b2_ref, o_ref = refs

    x = x_ref[...]
    # Layer 1: MXU matmul (compute_dtype operands, f32 accumulation); the
    # in-kernel cast rides spare VPU slots.  Bias + ReLU in f32.
    h = jnp.dot(x.astype(compute_dtype), w1_ref[...],
                preferred_element_type=jnp.float32)
    h = jnp.maximum(h + b1_ref[...], 0.0)
    # Layer 2: Linear, no final activation (final_act=False).
    out = jnp.dot(h.astype(compute_dtype), w2_ref[...],
                  preferred_element_type=jnp.float32)
    out = out + b2_ref[...]
    if add_residual:
        res = res_ref[...] if explicit_residual else x  # reuse loaded x tile
        out = out + res.astype(jnp.float32)
    # Narrow to the output dtype inside the kernel (data already in VMEM).
    o_ref[...] = out.astype(o_ref.dtype)


# --------------------------------------------------------------------------- #
# Parameter packing (hoisted out of the per-call path; do this once)
# --------------------------------------------------------------------------- #
def default_pack_factor(d_in, d_out):
    """Smallest P making P*d_in / P*d_out lane-dense (multiples of 128),
    preferring to fill the MXU K dimension: 256 on v6e/v7x (256-wide MXU),
    128 on v5e/v4 (where a larger P would just double MXU cycles/token)."""
    kind = jax.devices()[0].device_kind.lower()
    narrow_mxu = any(t in kind for t in ("v2", "v3", "v4", "v5"))
    prefer = 128 if narrow_mxu else 256
    best = None
    for p in (1, 2, 4, 8):
        if (p * d_in) % 128 == 0 and (p * d_out) % 128 == 0:
            if best is None:
                best = p
            if (p * d_in) % prefer == 0 and (p * d_out) % prefer == 0:
                return p
    return best if best is not None else 1


def _block_diag(w, p):
    """Block-diagonal replication of w (din, dout) -> (p*din, p*dout)."""
    if p == 1:
        return w
    din, dout = w.shape
    out = jnp.zeros((p * din, p * dout), w.dtype)
    for k in range(p):
        out = out.at[k * din:(k + 1) * din, k * dout:(k + 1) * dout].set(w)
    return out


def pack_ffn_params(w1, b1, w2, b2, *, pack, compute_dtype=jnp.bfloat16):
    """Build the block-diagonal / tiled parameters once (cache per model)."""
    D0, D1 = w1.shape
    D2 = w2.shape[1]
    w1k = _block_diag(jnp.asarray(w1, compute_dtype), pack)
    w2k = _block_diag(jnp.asarray(w2, compute_dtype), pack)
    b1k = jnp.tile(jnp.asarray(b1, jnp.float32).reshape(1, D1), (1, pack))
    b2k = jnp.tile(jnp.asarray(b2, jnp.float32).reshape(1, D2), (1, pack))
    return dict(w1=w1k, b1=b1k, w2=w2k, b2=b2k, pack=pack,
                dims=(D0, D1, D2), compute_dtype=compute_dtype)


# --------------------------------------------------------------------------- #
# Wrapper
# --------------------------------------------------------------------------- #
def ffn_pallas(x, params, residual=None, *, add_residual=True,
               tile_rows=8192, out_dtype=None, stream_buffers=2,
               core_parallel=False, vmem_budget_bytes=16 * 1024 * 1024):
    """FFN forward.

    x: (N, D0) in its producer dtype (no wrapper-side cast is performed).
    params: output of pack_ffn_params (built once per model).
    residual: optional (N, D2); when None and add_residual, residual = x.
    tile_rows: original rows per grid step (sweep 4096..16384).
    out_dtype: output dtype (default x.dtype); narrowed inside the kernel.
    stream_buffers: pipeline depth for the streamed x/residual/out specs
        (2 = default double buffer; 3 is the recommended sweep point).
    core_parallel: on v7x, shard the row axis across the two TensorCores
        explicitly with pltpu.CORE_PARALLEL instead of "parallel".
    """
    N, D0 = x.shape
    D0p, D1, D2 = params["dims"]
    assert D0 == D0p, "x feature dim does not match packed params"
    P = params["pack"]
    compute_dtype = params["compute_dtype"]
    out_dtype = out_dtype if out_dtype is not None else x.dtype

    explicit_res = add_residual and (residual is not None)
    if add_residual and not explicit_res:
        assert D2 == D0, "implicit residual requires D_out == D_in"

    # Pad N up to a multiple of P (<= P-1 zero rows) so lane-dense packing is
    # never dropped (the P=1 fallback was a ~4.5x masked-store cliff).
    Np = -(-N // P) * P
    if Np != N:
        x = jnp.pad(x, ((0, Np - N), (0, 0)))
        if explicit_res:
            residual = jnp.pad(residual, ((0, Np - N), (0, 0)))

    Ns = Np // P
    Din, Dh, Dout = P * D0, P * D1, P * D2

    xk = x.reshape(Ns, Din)                      # free row-major reshape
    resk = residual.reshape(Ns, Dout) if explicit_res else None

    # ---- tile sizing (super-rows, multiples of 8 sublanes) ----------------
    ts = max(8, (max(tile_rows, P) // P) // 8 * 8)

    # VMEM budget re-derived for the worst case across generations
    # (v5e 16 MiB default scoped / v7x 64 MiB physical): streamed buffers
    # plus the f32 intermediates must stay under vmem_budget_bytes.
    o_b = jnp.dtype(out_dtype).itemsize
    c_b = jnp.dtype(compute_dtype).itemsize
    per_row = (stream_buffers * Din * x.dtype.itemsize            # x stream
               + stream_buffers * Dout * o_b                      # out stream
               + (stream_buffers * Dout * residual.dtype.itemsize
                  if explicit_res else 0)                         # residual
               + Din * c_b + Dh * (4 + c_b) + Dout * 4)           # temporaries
    ts_cap = max(8, (vmem_budget_bytes // per_row) // 8 * 8)
    ts = min(ts, ts_cap)

    if ts >= Ns:
        ts = Ns
        # Keep >= 2 grid steps when there is enough work so the "parallel"
        # row axis can shard across v7x's two TensorCores.
        if Ns >= 16:
            half = -(-Ns // 2)
            ts = max(8, ((half + 7) // 8) * 8)

    grid = (pl.cdiv(Ns, ts),)   # ragged last tile handled by Pallas masking

    # ---- specs -------------------------------------------------------------
    def stream_spec(shape):
        kwargs = {}
        if stream_buffers != 2:   # pipeline-depth sweep knob (pl.Buffered)
            kwargs["pipeline_mode"] = pl.Buffered(stream_buffers)
        return pl.BlockSpec(shape, lambda i: (i, 0), **kwargs)

    in_specs = [
        stream_spec((ts, Din)),                       # packed x tile
        pl.BlockSpec((Din, Dh), lambda i: (0, 0)),    # W1 (VMEM-resident)
        pl.BlockSpec((1, Dh), lambda i: (0, 0)),      # b1
        pl.BlockSpec((Dh, Dout), lambda i: (0, 0)),   # W2 (VMEM-resident)
        pl.BlockSpec((1, Dout), lambda i: (0, 0)),    # b2
    ]
    args = [xk, params["w1"], params["b1"], params["w2"], params["b2"]]
    if explicit_res:
        in_specs.append(stream_spec((ts, Dout)))
        args.append(resk)

    dim_sem = (pltpu.CORE_PARALLEL,) if core_parallel else ("parallel",)

    kernel = functools.partial(_ffn_kernel, add_residual=add_residual,
                               explicit_residual=explicit_res,
                               compute_dtype=compute_dtype)

    out = pl.pallas_call(
        kernel,
        out_shape=jax.ShapeDtypeStruct((Ns, Dout), out_dtype),
        grid_spec=pltpu.PrefetchScalarGridSpec(
            num_scalar_prefetch=0,
            grid=grid,
            in_specs=in_specs,
            out_specs=stream_spec((ts, Dout)),
        ),
        compiler_params=pltpu.CompilerParams(
            dimension_semantics=dim_sem,
            vmem_limit_bytes=48 * 1024 * 1024,   # headroom within v7x 64 MiB
        ),
    )(*args)

    out = out.reshape(Np, D2)
    if Np != N:
        out = out[:N]
    return out


def ffn_reference(x, w1, b1, w2, b2, residual=None, add_residual=True):
    h = jnp.maximum(x @ w1 + b1, 0.0)
    out = h @ w2 + b2
    if not add_residual:
        return out
    res = x if residual is None else residual
    return res + out


if __name__ == "__main__":
    # embed_dims = [32, 64, 32]; batch=2, seq=8 -> N = 16 tokens.
    embed_dims = [32, 64, 32]
    batch, seq = 2, 8
    N = batch * seq
    D0, D1, D2 = embed_dims

    key = jax.random.PRNGKey(0)
    kx, kw1, kb1, kw2, kb2, kr, kt = jax.random.split(key, 7)

    x = jax.random.normal(kx, (batch, seq, D0), dtype=jnp.float32)
    # deterministic parameter init (synthetic, not a checkpoint load)
    w1 = jax.random.normal(kw1, (D0, D1), dtype=jnp.float32) * 0.05
    b1 = jax.random.normal(kb1, (1, D1), dtype=jnp.float32) * 0.01
    w2 = jax.random.normal(kw2, (D1, D2), dtype=jnp.float32) * 0.05
    b2 = jax.random.normal(kb2, (1, D2), dtype=jnp.float32) * 0.01

    # Generation-aware pack factor; parameters are packed ONCE (hoisted).
    P = default_pack_factor(D0, D2)
    params_f32 = pack_ffn_params(w1, b1, w2, b2, pack=P,
                                 compute_dtype=jnp.float32)
    params_bf16 = pack_ffn_params(w1, b1, w2, b2, pack=P)   # bf16 MXU operands

    x2d = x.reshape(N, D0)
    ref = ffn_reference(x2d, w1, b1, w2, b2)

    # 1) f32 compute, implicit residual (residual = x): exact check.
    out = jax.block_until_ready(ffn_pallas(x2d, params_f32))
    assert out.shape == (N, D2)
    assert jnp.allclose(out, ref, atol=1e-5, rtol=1e-5), "f32 mismatch"

    # 2) f32 compute, explicit external residual.
    res = jax.random.normal(kr, (N, D2), dtype=jnp.float32)
    out_r = jax.block_until_ready(ffn_pallas(x2d, params_f32, residual=res))
    ref_r = ffn_reference(x2d, w1, b1, w2, b2, residual=res)
    assert jnp.allclose(out_r, ref_r, atol=1e-5, rtol=1e-5), "residual mismatch"

    # 3) bf16 MXU operands with f32 I/O (v5e recommendation); f32 accumulation.
    out_c = jax.block_until_ready(ffn_pallas(x2d, params_bf16))
    assert jnp.allclose(out_c, ref, atol=7e-2, rtol=7e-2), "bf16-compute mismatch"

    # 4) bf16 I/O end-to-end: producer hands bf16 activations (no wrapper cast
    #    inside ffn_pallas); output narrowed to bf16 inside the kernel.
    x_bf16 = x2d.astype(jnp.bfloat16)
    out_bf16 = jax.block_until_ready(ffn_pallas(x_bf16, params_bf16))
    assert out_bf16.dtype == jnp.bfloat16
    assert jnp.allclose(out_bf16.astype(jnp.float32), ref,
                        atol=7e-2, rtol=7e-2), "bf16-io mismatch"

    # 5) ragged N (N % P != 0) exercises the pad-to-P path (no P=1 fallback).
    Nr = 19
    xr = jax.random.normal(kt, (Nr, D0), dtype=jnp.float32)
    out_rag = jax.block_until_ready(ffn_pallas(xr, params_f32))
    ref_rag = ffn_reference(xr, w1, b1, w2, b2)
    assert out_rag.shape == (Nr, D2)
    assert jnp.allclose(out_rag, ref_rag, atol=1e-5, rtol=1e-5), "ragged-N mismatch"

    out3d = out.reshape(batch, seq, D2)   # restore (batch, seq, D) layout
    jax.block_until_ready(out3d)
    print("KERNEL_OK")
</pallas_src>

<mosaic_0001>
module attributes {stable_mosaic.version = 11 : i64} {
  func.func @_ffn_kernel(%arg0: i32, %arg1: memref<2x256xf32, #tpu.memory_space<vmem>>, %arg2: memref<256x512xf32, #tpu.memory_space<vmem>>, %arg3: memref<1x512xf32, #tpu.memory_space<vmem>>, %arg4: memref<512x256xf32, #tpu.memory_space<vmem>>, %arg5: memref<1x256xf32, #tpu.memory_space<vmem>>, %arg6: memref<2x256xf32, #tpu.memory_space<vmem>>) attributes {dimension_semantics = [#tpu.dimension_semantics<parallel>], iteration_bounds = array<i64: 1>, scalar_prefetch = 0 : i64, scratch_operands = 0 : i64, tpu.core_type = #tpu.core_type<tc>, window_params = [{transform_indices = @transform_0, window_bounds = array<i64: 2, 256>}, {pipeline_mode = #tpu.pipeline_mode<synchronous>, transform_indices = @transform_1, window_bounds = array<i64: 256, 512>}, {pipeline_mode = #tpu.pipeline_mode<synchronous>, transform_indices = @transform_2, window_bounds = array<i64: 1, 512>}, {pipeline_mode = #tpu.pipeline_mode<synchronous>, transform_indices = @transform_3, window_bounds = array<i64: 512, 256>}, {pipeline_mode = #tpu.pipeline_mode<synchronous>, transform_indices = @transform_4, window_bounds = array<i64: 1, 256>}, {transform_indices = @transform_5, window_bounds = array<i64: 2, 256>}]} {
    %c0 = arith.constant 0 : index
    %c0_0 = arith.constant 0 : index
    %0 = vector.load %arg1[%c0, %c0_0] : memref<2x256xf32, #tpu.memory_space<vmem>>, vector<2x256xf32>
    %c0_1 = arith.constant 0 : index
    %c0_2 = arith.constant 0 : index
    %1 = vector.load %arg2[%c0_1, %c0_2] : memref<256x512xf32, #tpu.memory_space<vmem>>, vector<256x512xf32>
    %cst = arith.constant dense<0.000000e+00> : vector<2x512xf32>
    %2 = tpu.matmul %0, %1, %cst {dimension_numbers = #tpu.dot_dimension_numbers<[1], [0], [0], [1], [0, 0, 1, 1], [], []>} : vector<2x256xf32>, vector<256x512xf32>, vector<2x512xf32> -> vector<2x512xf32>
    %c0_3 = arith.constant 0 : index
    %c0_4 = arith.constant 0 : index
    %3 = vector.load %arg3[%c0_3, %c0_4] : memref<1x512xf32, #tpu.memory_space<vmem>>, vector<1x512xf32>
    %4 = vector.broadcast %3 : vector<1x512xf32> to vector<2x512xf32>
    %5 = arith.addf %2, %4 : vector<2x512xf32>
    %cst_5 = arith.constant 0.000000e+00 : f32
    %6 = vector.broadcast %cst_5 : f32 to vector<2x512xf32>
    %7 = arith.maximumf %5, %6 : vector<2x512xf32>
    %c0_6 = arith.constant 0 : index
    %c0_7 = arith.constant 0 : index
    %8 = vector.load %arg4[%c0_6, %c0_7] : memref<512x256xf32, #tpu.memory_space<vmem>>, vector<512x256xf32>
    %cst_8 = arith.constant dense<0.000000e+00> : vector<2x256xf32>
    %9 = tpu.matmul %7, %8, %cst_8 {dimension_numbers = #tpu.dot_dimension_numbers<[1], [0], [0], [1], [0, 0, 1, 1], [], []>} : vector<2x512xf32>, vector<512x256xf32>, vector<2x256xf32> -> vector<2x256xf32>
    %c0_9 = arith.constant 0 : index
    %c0_10 = arith.constant 0 : index
    %10 = vector.load %arg5[%c0_9, %c0_10] : memref<1x256xf32, #tpu.memory_space<vmem>>, vector<1x256xf32>
    %11 = vector.broadcast %10 : vector<1x256xf32> to vector<2x256xf32>
    %12 = arith.addf %9, %11 : vector<2x256xf32>
    %13 = arith.addf %12, %0 : vector<2x256xf32>
    %c0_11 = arith.constant 0 : index
    %c0_12 = arith.constant 0 : index
    %14 = vector.load %arg6[%c0_11, %c0_12] : memref<2x256xf32, #tpu.memory_space<vmem>>, vector<2x256xf32>
    tpu.vector_store %arg6[%c0_11, %c0_12], %13 {strides = array<i32>} : memref<2x256xf32, #tpu.memory_space<vmem>>, vector<2x256xf32>,
    return
  }
  func.func @transform_0(%arg0: i32) -> (i32, i32) {
    %c0_i32 = arith.constant 0 : i32
    %c0_i32_0 = arith.constant 0 : i32
    return %arg0, %c0_i32 : i32, i32
  }
  func.func @transform_1(%arg0: i32) -> (i32, i32) {
    %c0_i32 = arith.constant 0 : i32
    %c0_i32_0 = arith.constant 0 : i32
    %c0_i32_1 = arith.constant 0 : i32
    return %c0_i32, %c0_i32_0 : i32, i32
  }
  func.func @transform_2(%arg0: i32) -> (i32, i32) {
    %c0_i32 = arith.constant 0 : i32
    %c0_i32_0 = arith.constant 0 : i32
    %c0_i32_1 = arith.constant 0 : i32
    return %c0_i32, %c0_i32_0 : i32, i32
  }
  func.func @transform_3(%arg0: i32) -> (i32, i32) {
    %c0_i32 = arith.constant 0 : i32
    %c0_i32_0 = arith.constant 0 : i32
    %c0_i32_1 = arith.constant 0 : i32
    return %c0_i32, %c0_i32_0 : i32, i32
  }
  func.func @transform_4(%arg0: i32) -> (i32, i32) {
    %c0_i32 = arith.constant 0 : i32
    %c0_i32_0 = arith.constant 0 : i32
    %c0_i32_1 = arith.constant 0 : i32
    return %c0_i32, %c0_i32_0 : i32, i32
  }
  func.func @transform_5(%arg0: i32) -> (i32, i32) {
    %c0_i32 = arith.constant 0 : i32
    %c0_i32_0 = arith.constant 0 : i32
    return %arg0, %c0_i32 : i32, i32
  }
}

</mosaic_0001>

<llo_original>
// kernel: tpu_custom_call.1
$region0: #{tpu_custom_call.1}
  #allocation0 [shape = 'u32[]', space=smem, size = 0x4, offset = 0x4, fixed_abs, tag = 'smem constant byte address 0x4 - core index']
  #allocation1 [shape = 'u32[144,128]{1,0:T(1,128)}', space=vmem, size = 0x12000, scoped, tag = 'internal scratch']
  %s0 = inlined_call_operand.hbm [shape: f32[2,256], index: 0, kind: input, shape index: {}]
  %s1 = inlined_call_operand.hbm [shape: f32[256,512], index: 1, kind: input, shape index: {}]
  %s2 = inlined_call_operand.vmem [shape: f32[1,512], index: 2, kind: input, shape index: {}]
  %s3 = inlined_call_operand.hbm [shape: f32[512,256], index: 3, kind: input, shape index: {}]
  %s4 = inlined_call_operand.vmem [shape: f32[1,256], index: 4, kind: input, shape index: {}]
  %s5 = inlined_call_operand.hbm [shape: f32[2,256], index: 5, kind: output, shape index: {}]
  %s6 = sld [smem:[#allocation0]]
  $region42: #{tpu_custom_call.1} parent=0
    _
  %s8 = ssub.s32 1, %s6
  %s9 = scalar_select 0, %s8, %s6
  $region1: #{tpu_custom_call.1} parent=0
    #allocation2 [shape = 'u8[2048]{0}', space=vmem, size = 0x800, scoped, tag = 'input window, operand 0, single buffered']
    #allocation3 [shape = 's32[1]{0}', space=sflag, size = 0x4, scoped, tag = 'scoped memory for tpu_custom_call.1']
    #allocation4 [shape = 's32[1]{0}', space=sflag, size = 0x4, scoped, tag = 'scoped memory for tpu_custom_call.1']
    #allocation5 [shape = 'u8[524288]{0}', space=vmem, size = 0x80000, scoped, tag = 'input window, operand 1, single buffered']
    #allocation6 [shape = 's32[1]{0}', space=sflag, size = 0x4, scoped, tag = 'scoped memory for tpu_custom_call.1']
    #allocation7 [shape = 'u8[524288]{0}', space=vmem, size = 0x80000, scoped, tag = 'input window, operand 3, single buffered']
    #allocation8 [shape = 'u8[2048]{0}', space=vmem, size = 0x800, scoped, tag = 'output window, operand 0, single buffered']
    %10 = vsyncpa [#allocation3], 0
    %11 = vsyncpa [#allocation6], 0
    %12 = vsyncpa [#allocation4], 0
    // Predicated region
    $region2: #{tpu_custom_call.1} parent=1 // pred_check
      _
    $region3: #{tpu_custom_call.1} parent=1 // pred_check_branch
      %14 = sbr.rel (0) target = $region5
    $region4: #{tpu_custom_call.1} parent=1 // pred_region
      %s16 = ssub.s32 64, 64
      %17 = vsyncadd [#allocation3], %s16
      %s19 = sshll.u32 [#allocation2], 4
      %s20 = int_to_ptr.vmem [resolvable:$true] %s19
      %22 = dma.hbm_to_vmem [thread:$0]  %s0, 64, %s20, [#allocation3]
    $region5: #{tpu_custom_call.1} parent=1 // pred_fallthru
      _
    // Predicated region
    $region6: #{tpu_custom_call.1} parent=1 // pred_check
      _
    $region7: #{tpu_custom_call.1} parent=1 // pred_check_branch
      %24 = sbr.rel (0) target = $region9
    $region8: #{tpu_custom_call.1} parent=1 // pred_region
      %s26 = ssub.s32 16384, 16384
      %27 = vsyncadd [#allocation6], %s26
      %s28 = sshll.u32 [#allocation5], 4
      %s29 = int_to_ptr.vmem [resolvable:$true] %s28
      %34 = dma.hbm_to_vmem [thread:$0]  %s1, 16384, %s29, [#allocation6], 512, 512, 32
    $region9: #{tpu_custom_call.1} parent=1 // pred_fallthru
      _
    // Predicated region
    $region10: #{tpu_custom_call.1} parent=1 // pred_check
      _
    $region11: #{tpu_custom_call.1} parent=1 // pred_check_branch
      %36 = sbr.rel (0) target = $region13
    $region12: #{tpu_custom_call.1} parent=1 // pred_region
      _
    $region13: #{tpu_custom_call.1} parent=1 // pred_fallthru
      _
    // Predicated region
    $region14: #{tpu_custom_call.1} parent=1 // pred_check
      _
    $region15: #{tpu_custom_call.1} parent=1 // pred_check_branch
      %38 = sbr.rel (0) target = $region17
    $region16: #{tpu_custom_call.1} parent=1 // pred_region
      %s40 = ssub.s32 16384, 16384
      %41 = vsyncadd [#allocation6], %s40
      %s42 = sshll.u32 [#allocation7], 4
      %s43 = int_to_ptr.vmem [resolvable:$true] %s42
      %48 = dma.hbm_to_vmem [thread:$0]  %s3, 16384, %s43, [#allocation6], 256, 256, 16
    $region17: #{tpu_custom_call.1} parent=1 // pred_fallthru
      _
    // Predicated region
    $region18: #{tpu_custom_call.1} parent=1 // pred_check
      _
    $region19: #{tpu_custom_call.1} parent=1 // pred_check_branch
      %50 = sbr.rel (0) target = $region21
    $region20: #{tpu_custom_call.1} parent=1 // pred_region
      _
    $region21: #{tpu_custom_call.1} parent=1 // pred_fallthru
      _
    // Predicated region
    $region22: #{tpu_custom_call.1} parent=1 // pred_check
      _
    $region23: #{tpu_custom_call.1} parent=1 // pred_check_branch
      %52 = sbr.rel (0) target = $region25
    $region24: #{tpu_custom_call.1} parent=1 // pred_region
      %53 = dma.done [#allocation3], 64
    $region25: #{tpu_custom_call.1} parent=1 // pred_fallthru
      _
    // Predicated region
    $region26: #{tpu_custom_call.1} parent=1 // pred_check
      _
    $region27: #{tpu_custom_call.1} parent=1 // pred_check_branch
      %55 = sbr.rel (0) target = $region29
    $region28: #{tpu_custom_call.1} parent=1 // pred_region
      %56 = dma.done [#allocation6], 16384
    $region29: #{tpu_custom_call.1} parent=1 // pred_fallthru
      _
    // Predicated region
    $region30: #{tpu_custom_call.1} parent=1 // pred_check
      _
    $region31: #{tpu_custom_call.1} parent=1 // pred_check_branch
      %58 = sbr.rel (0) target = $region33
    $region32: #{tpu_custom_call.1} parent=1 // pred_region
      %59 = dma.done [#allocation6], 16384
    $region33: #{tpu_custom_call.1} parent=1 // pred_fallthru
      _
    %v60 = vld [vmem:[#allocation2] sm:$0xf]
    %v61 = vld [vmem:[#allocation5] sm:$0xff]
    %v62 = vld [vmem:[#allocation5 + $0x8] sm:$0xff]
    %v63 = vld [vmem:[#allocation5 + $0x10] sm:$0xff]
    %v64 = vld [vmem:[#allocation5 + $0x18] sm:$0xff]
    %v65 = vld [vmem:[#allocation5 + $0x20] sm:$0xff]
    %v66 = vld [vmem:[#allocation5 + $0x28] sm:$0xff]
    %v67 = vld [vmem:[#allocation5 + $0x30] sm:$0xff]
    %v68 = vld [vmem:[#allocation5 + $0x38] sm:$0xff]
    %v69 = vld [vmem:[#allocation5 + $0x40] sm:$0xff]
    %v70 = vld [vmem:[#allocation5 + $0x48] sm:$0xff]
    %v71 = vld [vmem:[#allocation5 + $0x50] sm:$0xff]
    %v72 = vld [vmem:[#allocation5 + $0x58] sm:$0xff]
    %v73 = vld [vmem:[#allocation5 + $0x60] sm:$0xff]
    %v74 = vld [vmem:[#allocation5 + $0x68] sm:$0xff]
    %v75 = vld [vmem:[#allocation5 + $0x70] sm:$0xff]
    %v76 = vld [vmem:[#allocation5 + $0x78] sm:$0xff]
    %v77 = vld [vmem:[#allocation5 + $0x80] sm:$0xff]
    %v78 = vld [vmem:[#allocation5 + $0x88] sm:$0xff]
    %v79 = vld [vmem:[#allocation5 + $0x90] sm:$0xff]
    %v80 = vld [vmem:[#allocation5 + $0x98] sm:$0xff]
    %v81 = vld [vmem:[#allocation5 + $0xa0] sm:$0xff]
    %v82 = vld [vmem:[#allocation5 + $0xa8] sm:$0xff]
    %v83 = vld [vmem:[#allocation5 + $0xb0] sm:$0xff]
    %v84 = vld [vmem:[#allocation5 + $0xb8] sm:$0xff]
    %v85 = vld [vmem:[#allocation5 + $0xc0] sm:$0xff]
    %v86 = vld [vmem:[#allocation5 + $0xc8] sm:$0xff]
    %v87 = vld [vmem:[#allocation5 + $0xd0] sm:$0xff]
    %v88 = vld [vmem:[#allocation5 + $0xd8] sm:$0xff]
    %v89 = vld [vmem:[#allocation5 + $0xe0] sm:$0xff]
    %v90 = vld [vmem:[#allocation5 + $0xe8] sm:$0xff]
    %v91 = vld [vmem:[#allocation5 + $0xf0] sm:$0xff]
    %v92 = vld [vmem:[#allocation5 + $0xf8] sm:$0xff]
    %v93 = vld [vmem:[#allocation5 + $0x100] sm:$0xff]
    %v94 = vld [vmem:[#allocation5 + $0x108] sm:$0xff]
    %v95 = vld [vmem:[#allocation5 + $0x110] sm:$0xff]
    %v96 = vld [vmem:[#allocation5 + $0x118] sm:$0xff]
    %v97 = vld [vmem:[#allocation5 + $0x120] sm:$0xff]
    %v98 = vld [vmem:[#allocation5 + $0x128] sm:$0xff]
    %v99 = vld [vmem:[#allocation5 + $0x130] sm:$0xff]
    %v100 = vld [vmem:[#allocation5 + $0x138] sm:$0xff]
    %v101 = vld [vmem:[#allocation5 + $0x140] sm:$0xff]
    %v102 = vld [vmem:[#allocation5 + $0x148] sm:$0xff]
    %v103 = vld [vmem:[#allocation5 + $0x150] sm:$0xff]
    %v104 = vld [vmem:[#allocation5 + $0x158] sm:$0xff]
    %v105 = vld [vmem:[#allocation5 + $0x160] sm:$0xff]
    %v106 = vld [vmem:[#allocation5 + $0x168] sm:$0xff]
    %v107 = vld [vmem:[#allocation5 + $0x170] sm:$0xff]
    %v108 = vld [vmem:[#allocation5 + $0x178] sm:$0xff]
    %v109 = vld [vmem:[#allocation5 + $0x180] sm:$0xff]
    %v110 = vld [vmem:[#allocation5 + $0x188] sm:$0xff]
    %v111 = vld [vmem:[#allocation5 + $0x190] sm:$0xff]
    %v112 = vld [vmem:[#allocation5 + $0x198] sm:$0xff]
    %v113 = vld [vmem:[#allocation5 + $0x1a0] sm:$0xff]
    %v114 = vld [vmem:[#allocation5 + $0x1a8] sm:$0xff]
    %v115 = vld [vmem:[#allocation5 + $0x1b0] sm:$0xff]
    %v116 = vld [vmem:[#allocation5 + $0x1b8] sm:$0xff]
    %v117 = vld [vmem:[#allocation5 + $0x1c0] sm:$0xff]
    %v118 = vld [vmem:[#allocation5 + $0x1c8] sm:$0xff]
    %v119 = vld [vmem:[#allocation5 + $0x1d0] sm:$0xff]
    %v120 = vld [vmem:[#allocation5 + $0x1d8] sm:$0xff]
    %v121 = vld [vmem:[#allocation5 + $0x1e0] sm:$0xff]
    %v122 = vld [vmem:[#allocation5 + $0x1e8] sm:$0xff]
    %v123 = vld [vmem:[#allocation5 + $0x1f0] sm:$0xff]
    %v124 = vld [vmem:[#allocation5 + $0x1f8] sm:$0xff]
    %v125 = vld [vmem:[#allocation5 + $0x200] sm:$0xff]
    %v126 = vld [vmem:[#allocation5 + $0x208] sm:$0xff]
    %v127 = vld [vmem:[#allocation5 + $0x210] sm:$0xff]
    %v128 = vld [vmem:[#allocation5 + $0x218] sm:$0xff]
    %v129 = vld [vmem:[#allocation5 + $0x220] sm:$0xff]
    %v130 = vld [vmem:[#allocation5 + $0x228] sm:$0xff]
    %v131 = vld [vmem:[#allocation5 + $0x230] sm:$0xff]
    %v132 = vld [vmem:[#allocation5 + $0x238] sm:$0xff]
    %v133 = vld [vmem:[#allocation5 + $0x240] sm:$0xff]
    %v134 = vld [vmem:[#allocation5 + $0x248] sm:$0xff]
    %v135 = vld [vmem:[#allocation5 + $0x250] sm:$0xff]
    %v136 = vld [vmem:[#allocation5 + $0x258] sm:$0xff]
    %v137 = vld [vmem:[#allocation5 + $0x260] sm:$0xff]
    %v138 = vld [vmem:[#allocation5 + $0x268] sm:$0xff]
    %v139 = vld [vmem:[#allocation5 + $0x270] sm:$0xff]
    %v140 = vld [vmem:[#allocation5 + $0x278] sm:$0xff]
    %v141 = vld [vmem:[#allocation5 + $0x280] sm:$0xff]
    %v142 = vld [vmem:[#allocation5 + $0x288] sm:$0xff]
    %v143 = vld [vmem:[#allocation5 + $0x290] sm:$0xff]
    %v144 = vld [vmem:[#allocation5 + $0x298] sm:$0xff]
    %v145 = vld [vmem:[#allocation5 + $0x2a0] sm:$0xff]
    %v146 = vld [vmem:[#allocation5 + $0x2a8] sm:$0xff]
    %v147 = vld [vmem:[#allocation5 + $0x2b0] sm:$0xff]
    %v148 = vld [vmem:[#allocation5 + $0x2b8] sm:$0xff]
    %v149 = vld [vmem:[#allocation5 + $0x2c0] sm:$0xff]
    %v150 = vld [vmem:[#allocation5 + $0x2c8] sm:$0xff]
    %v151 = vld [vmem:[#allocation5 + $0x2d0] sm:$0xff]
    %v152 = vld [vmem:[#allocation5 + $0x2d8] sm:$0xff]
    %v153 = vld [vmem:[#allocation5 + $0x2e0] sm:$0xff]
    %v154 = vld [vmem:[#allocation5 + $0x2e8] sm:$0xff]
    %v155 = vld [vmem:[#allocation5 + $0x2f0] sm:$0xff]
    %v156 = vld [vmem:[#allocation5 + $0x2f8] sm:$0xff]
    %v157 = vld [vmem:[#allocation5 + $0x300] sm:$0xff]
    %v158 = vld [vmem:[#allocation5 + $0x308] sm:$0xff]
    %v159 = vld [vmem:[#allocation5 + $0x310] sm:$0xff]
    %v160 = vld [vmem:[#allocation5 + $0x318] sm:$0xff]
    %v161 = vld [vmem:[#allocation5 + $0x320] sm:$0xff]
    %v162 = vld [vmem:[#allocation5 + $0x328] sm:$0xff]
    %v163 = vld [vmem:[#allocation5 + $0x330] sm:$0xff]
    %v164 = vld [vmem:[#allocation5 + $0x338] sm:$0xff]
    %v165 = vld [vmem:[#allocation5 + $0x340] sm:$0xff]
    %v166 = vld [vmem:[#allocation5 + $0x348] sm:$0xff]
    %v167 = vld [vmem:[#allocation5 + $0x350] sm:$0xff]
    %v168 = vld [vmem:[#allocation5 + $0x358] sm:$0xff]
    %v169 = vld [vmem:[#allocation5 + $0x360] sm:$0xff]
    %v170 = vld [vmem:[#allocation5 + $0x368] sm:$0xff]
    %v171 = vld [vmem:[#allocation5 + $0x370] sm:$0xff]
    %v172 = vld [vmem:[#allocation5 + $0x378] sm:$0xff]
    %v173 = vld [vmem:[#allocation5 + $0x380] sm:$0xff]
    %v174 = vld [vmem:[#allocation5 + $0x388] sm:$0xff]
    %v175 = vld [vmem:[#allocation5 + $0x390] sm:$0xff]
    %v176 = vld [vmem:[#allocation5 + $0x398] sm:$0xff]
    %v177 = vld [vmem:[#allocation5 + $0x3a0] sm:$0xff]
    %v178 = vld [vmem:[#allocation5 + $0x3a8] sm:$0xff]
    %v179 = vld [vmem:[#allocation5 + $0x3b0] sm:$0xff]
    %v180 = vld [vmem:[#allocation5 + $0x3b8] sm:$0xff]
    %v181 = vld [vmem:[#allocation5 + $0x3c0] sm:$0xff]
    %v182 = vld [vmem:[#allocation5 + $0x3c8] sm:$0xff]
    %v183 = vld [vmem:[#allocation5 + $0x3d0] sm:$0xff]
    %v184 = vld [vmem:[#allocation5 + $0x3d8] sm:$0xff]
    %v185 = vld [vmem:[#allocation5 + $0x3e0] sm:$0xff]
    %v186 = vld [vmem:[#allocation5 + $0x3e8] sm:$0xff]
    %v187 = vld [vmem:[#allocation5 + $0x3f0] sm:$0xff]
    %v188 = vld [vmem:[#allocation5 + $0x3f8] sm:$0xff]
    %v189 = vld [vmem:[%s2] sm:$0xf]
    %v191 = vlaneseq
    %v192 = vshrl.u32 %v191, 7
    %v193 = vsub.s32 0, %v192
    %v194 = vrot.slane %v189, %v193
    %v195 = vlaneseq
    %v196 = vshrl.u32 %v195, 7
    %v197 = vsub.s32 1, %v196
    %v198 = vrot.slane %v189, %v197
    %v199 = vlaneseq
    %v200 = vshrl.u32 %v199, 7
    %v201 = vsub.s32 2, %v200
    %v202 = vrot.slane %v189, %v201
    %v203 = vlaneseq
    %v204 = vshrl.u32 %v203, 7
    %v205 = vsub.s32 3, %v204
    %v206 = vrot.slane %v189, %v205
    %v213 = vunpack.c.l.s4 1983009808
    %v214 = vunpack.c.0.s8 %v213
    %v215 = vlaneseq
    %v216 = vshrl.u32 %v215, 7
    %v217 = vsub.s32 %v214, %v216
    %v218 = vrot.slane %v60, %v217
    %v219 = vcombine.high %v218, %v218
    %222 = vmatprep.subr.mxu0 %v62
    %223 = vmatpush1.msra.mxu0 %v61
    %224 = vmatprep.subr.mxu0 %v66
    %225 = vmatpush1.msra.mxu0 %v65
    %226 = vmatprep.subr.mxu0 %v70
    %227 = vmatpush1.msra.mxu0 %v69
    %228 = vmatprep.subr.mxu0 %v74
    %229 = vmatpush1.msra.mxu0 %v73
    %230 = vmatprep.subr.mxu0 %v78
    %231 = vmatpush1.msra.mxu0 %v77
    %232 = vmatprep.subr.mxu0 %v82
    %233 = vmatpush1.msra.mxu0 %v81
    %234 = vmatprep.subr.mxu0 %v86
    %235 = vmatpush1.msra.mxu0 %v85
    %236 = vmatprep.subr.mxu0 %v90
    %237 = vmatpush1.msra.mxu0 %v89
    %238 = vmatprep.subr.mxu0 %v94
    %239 = vmatpush1.msra.mxu0 %v93
    %240 = vmatprep.subr.mxu0 %v98
    %241 = vmatpush1.msra.mxu0 %v97
    %242 = vmatprep.subr.mxu0 %v102
    %243 = vmatpush1.msra.mxu0 %v101
    %244 = vmatprep.subr.mxu0 %v106
    %245 = vmatpush1.msra.mxu0 %v105
    %246 = vmatprep.subr.mxu0 %v110
    %247 = vmatpush1.msra.mxu0 %v109
    %248 = vmatprep.subr.mxu0 %v114
    %249 = vmatpush1.msra.mxu0 %v113
    %250 = vmatprep.subr.mxu0 %v118
    %251 = vmatpush1.msra.mxu0 %v117
    %252 = vmatprep.subr.mxu0 %v122
    %253 = vmatpush1.msra.mxu0 %v121
    %254 = vmatprep.subr.mxu0 %v126
    %255 = vmatpush1.msra.mxu0 %v125
    %256 = vmatprep.subr.mxu0 %v130
    %257 = vmatpush1.msra.mxu0 %v129
    %258 = vmatprep.subr.mxu0 %v134
    %259 = vmatpush1.msra.mxu0 %v133
    %260 = vmatprep.subr.mxu0 %v138
    %261 = vmatpush1.msra.mxu0 %v137
    %262 = vmatprep.subr.mxu0 %v142
    %263 = vmatpush1.msra.mxu0 %v141
    %264 = vmatprep.subr.mxu0 %v146
    %265 = vmatpush1.msra.mxu0 %v145
    %266 = vmatprep.subr.mxu0 %v150
    %267 = vmatpush1.msra.mxu0 %v149
    %268 = vmatprep.subr.mxu0 %v154
    %269 = vmatpush1.msra.mxu0 %v153
    %270 = vmatprep.subr.mxu0 %v158
    %271 = vmatpush1.msra.mxu0 %v157
    %272 = vmatprep.subr.mxu0 %v162
    %273 = vmatpush1.msra.mxu0 %v161
    %274 = vmatprep.subr.mxu0 %v166
    %275 = vmatpush1.msra.mxu0 %v165
    %276 = vmatprep.subr.mxu0 %v170
    %277 = vmatpush1.msra.mxu0 %v169
    %278 = vmatprep.subr.mxu0 %v174
    %279 = vmatpush1.msra.mxu0 %v173
    %280 = vmatprep.subr.mxu0 %v178
    %281 = vmatpush1.msra.mxu0 %v177
    %282 = vmatprep.subr.mxu0 %v182
    %283 = vmatpush1.msra.mxu0 %v181
    %284 = vmatprep.subr.mxu0 %v186
    %285 = vmatpush1.msra.mxu0 %v185
    %286 = vmatprep.mubr.f32.mxu0 %v219
    %287 = vmatmul.mubr.f32.gmra.mrb[0].mxu0 %v218
    %v288 = vpop.f32.mrb[0].mxu0
    %v289 = vadd.f32 %v194, %v288
    %v290 = vpop.f32.mrb[0].mxu0
    %v291 = vadd.f32 %v198, %v290
    %292 = vdwg.mxu0
    %293 = vmatprep.subr.mxu0 %v64
    %294 = vmatpush1.msra.mxu0 %v63
    %295 = vmatprep.subr.mxu0 %v68
    %296 = vmatpush1.msra.mxu0 %v67
    %297 = vmatprep.subr.mxu0 %v72
    %298 = vmatpush1.msra.mxu0 %v71
    %299 = vmatprep.subr.mxu0 %v76
    %300 = vmatpush1.msra.mxu0 %v75
    %301 = vmatprep.subr.mxu0 %v80
    %302 = vmatpush1.msra.mxu0 %v79
    %303 = vmatprep.subr.mxu0 %v84
    %304 = vmatpush1.msra.mxu0 %v83
    %305 = vmatprep.subr.mxu0 %v88
    %306 = vmatpush1.msra.mxu0 %v87
    %307 = vmatprep.subr.mxu0 %v92
    %308 = vmatpush1.msra.mxu0 %v91
    %309 = vmatprep.subr.mxu0 %v96
    %310 = vmatpush1.msra.mxu0 %v95
    %311 = vmatprep.subr.mxu0 %v100
    %312 = vmatpush1.msra.mxu0 %v99
    %313 = vmatprep.subr.mxu0 %v104
    %314 = vmatpush1.msra.mxu0 %v103
    %315 = vmatprep.subr.mxu0 %v108
    %316 = vmatpush1.msra.mxu0 %v107
    %317 = vmatprep.subr.mxu0 %v112
    %318 = vmatpush1.msra.mxu0 %v111
    %319 = vmatprep.subr.mxu0 %v116
    %320 = vmatpush1.msra.mxu0 %v115
    %321 = vmatprep.subr.mxu0 %v120
    %322 = vmatpush1.msra.mxu0 %v119
    %323 = vmatprep.subr.mxu0 %v124
    %324 = vmatpush1.msra.mxu0 %v123
    %325 = vmatprep.subr.mxu0 %v128
    %326 = vmatpush1.msra.mxu0 %v127
    %327 = vmatprep.subr.mxu0 %v132
    %328 = vmatpush1.msra.mxu0 %v131
    %329 = vmatprep.subr.mxu0 %v136
    %330 = vmatpush1.msra.mxu0 %v135
    %331 = vmatprep.subr.mxu0 %v140
    %332 = vmatpush1.msra.mxu0 %v139
    %333 = vmatprep.subr.mxu0 %v144
    %334 = vmatpush1.msra.mxu0 %v143
    %335 = vmatprep.subr.mxu0 %v148
    %336 = vmatpush1.msra.mxu0 %v147
    %337 = vmatprep.subr.mxu0 %v152
    %338 = vmatpush1.msra.mxu0 %v151
    %339 = vmatprep.subr.mxu0 %v156
    %340 = vmatpush1.msra.mxu0 %v155
    %341 = vmatprep.subr.mxu0 %v160
    %342 = vmatpush1.msra.mxu0 %v159
    %343 = vmatprep.subr.mxu0 %v164
    %344 = vmatpush1.msra.mxu0 %v163
    %345 = vmatprep.subr.mxu0 %v168
    %346 = vmatpush1.msra.mxu0 %v167
    %347 = vmatprep.subr.mxu0 %v172
    %348 = vmatpush1.msra.mxu0 %v171
    %349 = vmatprep.subr.mxu0 %v176
    %350 = vmatpush1.msra.mxu0 %v175
    %351 = vmatprep.subr.mxu0 %v180
    %352 = vmatpush1.msra.mxu0 %v179
    %353 = vmatprep.subr.mxu0 %v184
    %354 = vmatpush1.msra.mxu0 %v183
    %355 = vmatprep.subr.mxu0 %v188
    %356 = vmatpush1.msra.mxu0 %v187
    %357 = vmatprep.mubr.f32.mxu0 %v219
    %358 = vmatmul.mubr.f32.gmra.mrb[0].mxu0 %v218
    %v359 = vpop.f32.mrb[0].mxu0
    %v360 = vadd.f32 %v202, %v359
    %v361 = vpop.f32.mrb[0].mxu0
    %v362 = vadd.f32 %v206, %v361
    %363 = vdwg.mxu0
    %v364 = vmax.f32 %v289, 0.0
    %v365 = vmax.f32 %v291, 0.0
    %v366 = vmax.f32 %v360, 0.0
    %v367 = vmax.f32 %v362, 0.0
    %v368 = vld [vmem:[#allocation7] sm:$0xff]
    %v369 = vld [vmem:[#allocation7 + $0x8] sm:$0xff]
    %v370 = vld [vmem:[#allocation7 + $0x10] sm:$0xff]
    %v371 = vld [vmem:[#allocation7 + $0x18] sm:$0xff]
    %v372 = vld [vmem:[#allocation7 + $0x20] sm:$0xff]
    %v373 = vld [vmem:[#allocation7 + $0x28] sm:$0xff]
    %v374 = vld [vmem:[#allocation7 + $0x30] sm:$0xff]
    %v375 = vld [vmem:[#allocation7 + $0x38] sm:$0xff]
    %v376 = vld [vmem:[#allocation7 + $0x40] sm:$0xff]
    %v377 = vld [vmem:[#allocation7 + $0x48] sm:$0xff]
    %v378 = vld [vmem:[#allocation7 + $0x50] sm:$0xff]
    %v379 = vld [vmem:[#allocation7 + $0x58] sm:$0xff]
    %v380 = vld [vmem:[#allocation7 + $0x60] sm:$0xff]
    %v381 = vld [vmem:[#allocation7 + $0x68] sm:$0xff]
    %v382 = vld [vmem:[#allocation7 + $0x70] sm:$0xff]
    %v383 = vld [vmem:[#allocation7 + $0x78] sm:$0xff]
    %v384 = vld [vmem:[#allocation7 + $0x80] sm:$0xff]
    %v385 = vld [vmem:[#allocation7 + $0x88] sm:$0xff]
    %v386 = vld [vmem:[#allocation7 + $0x90] sm:$0xff]
    %v387 = vld [vmem:[#allocation7 + $0x98] sm:$0xff]
    %v388 = vld [vmem:[#allocation7 + $0xa0] sm:$0xff]
    %v389 = vld [vmem:[#allocation7 + $0xa8] sm:$0xff]
    %v390 = vld [vmem:[#allocation7 + $0xb0] sm:$0xff]
    %v391 = vld [vmem:[#allocation7 + $0xb8] sm:$0xff]
    %v392 = vld [vmem:[#allocation7 + $0xc0] sm:$0xff]
    %v393 = vld [vmem:[#allocation7 + $0xc8] sm:$0xff]
    %v394 = vld [vmem:[#allocation7 + $0xd0] sm:$0xff]
    %v395 = vld [vmem:[#allocation7 + $0xd8] sm:$0xff]
    %v396 = vld [vmem:[#allocation7 + $0xe0] sm:$0xff]
    %v397 = vld [vmem:[#allocation7 + $0xe8] sm:$0xff]
    %v398 = vld [vmem:[#allocation7 + $0xf0] sm:$0xff]
    %v399 = vld [vmem:[#allocation7 + $0xf8] sm:$0xff]
    %v400 = vld [vmem:[#allocation7 + $0x100] sm:$0xff]
    %v401 = vld [vmem:[#allocation7 + $0x108] sm:$0xff]
    %v402 = vld [vmem:[#allocation7 + $0x110] sm:$0xff]
    %v403 = vld [vmem:[#allocation7 + $0x118] sm:$0xff]
    %v404 = vld [vmem:[#allocation7 + $0x120] sm:$0xff]
    %v405 = vld [vmem:[#allocation7 + $0x128] sm:$0xff]
    %v406 = vld [vmem:[#allocation7 + $0x130] sm:$0xff]
    %v407 = vld [vmem:[#allocation7 + $0x138] sm:$0xff]
    %v408 = vld [vmem:[#allocation7 + $0x140] sm:$0xff]
    %v409 = vld [vmem:[#allocation7 + $0x148] sm:$0xff]
    %v410 = vld [vmem:[#allocation7 + $0x150] sm:$0xff]
    %v411 = vld [vmem:[#allocation7 + $0x158] sm:$0xff]
    %v412 = vld [vmem:[#allocation7 + $0x160] sm:$0xff]
    %v413 = vld [vmem:[#allocation7 + $0x168] sm:$0xff]
    %v414 = vld [vmem:[#allocation7 + $0x170] sm:$0xff]
    %v415 = vld [vmem:[#allocation7 + $0x178] sm:$0xff]
    %v416 = vld [vmem:[#allocation7 + $0x180] sm:$0xff]
    %v417 = vld [vmem:[#allocation7 + $0x188] sm:$0xff]
    %v418 = vld [vmem:[#allocation7 + $0x190] sm:$0xff]
    %v419 = vld [vmem:[#allocation7 + $0x198] sm:$0xff]
    %v420 = vld [vmem:[#allocation7 + $0x1a0] sm:$0xff]
    %v421 = vld [vmem:[#allocation7 + $0x1a8] sm:$0xff]
    %v422 = vld [vmem:[#allocation7 + $0x1b0] sm:$0xff]
    %v423 = vld [vmem:[#allocation7 + $0x1b8] sm:$0xff]
    %v424 = vld [vmem:[#allocation7 + $0x1c0] sm:$0xff]
    %v425 = vld [vmem:[#allocation7 + $0x1c8] sm:$0xff]
    %v426 = vld [vmem:[#allocation7 + $0x1d0] sm:$0xff]
    %v427 = vld [vmem:[#allocation7 + $0x1d8] sm:$0xff]
    %v428 = vld [vmem:[#allocation7 + $0x1e0] sm:$0xff]
    %v429 = vld [vmem:[#allocation7 + $0x1e8] sm:$0xff]
    %v430 = vld [vmem:[#allocation7 + $0x1f0] sm:$0xff]
    %v431 = vld [vmem:[#allocation7 + $0x1f8] sm:$0xff]
    %v432 = vld [vmem:[#allocation7 + $0x200] sm:$0xff]
    %v433 = vld [vmem:[#allocation7 + $0x208] sm:$0xff]
    %v434 = vld [vmem:[#allocation7 + $0x210] sm:$0xff]
    %v435 = vld [vmem:[#allocation7 + $0x218] sm:$0xff]
    %v436 = vld [vmem:[#allocation7 + $0x220] sm:$0xff]
    %v437 = vld [vmem:[#allocation7 + $0x228] sm:$0xff]
    %v438 = vld [vmem:[#allocation7 + $0x230] sm:$0xff]
    %v439 = vld [vmem:[#allocation7 + $0x238] sm:$0xff]
    %v440 = vld [vmem:[#allocation7 + $0x240] sm:$0xff]
    %v441 = vld [vmem:[#allocation7 + $0x248] sm:$0xff]
    %v442 = vld [vmem:[#allocation7 + $0x250] sm:$0xff]
    %v443 = vld [vmem:[#allocation7 + $0x258] sm:$0xff]
    %v444 = vld [vmem:[#allocation7 + $0x260] sm:$0xff]
    %v445 = vld [vmem:[#allocation7 + $0x268] sm:$0xff]
    %v446 = vld [vmem:[#allocation7 + $0x270] sm:$0xff]
    %v447 = vld [vmem:[#allocation7 + $0x278] sm:$0xff]
    %v448 = vld [vmem:[#allocation7 + $0x280] sm:$0xff]
    %v449 = vld [vmem:[#allocation7 + $0x288] sm:$0xff]
    %v450 = vld [vmem:[#allocation7 + $0x290] sm:$0xff]
    %v451 = vld [vmem:[#allocation7 + $0x298] sm:$0xff]
    %v452 = vld [vmem:[#allocation7 + $0x2a0] sm:$0xff]
    %v453 = vld [vmem:[#allocation7 + $0x2a8] sm:$0xff]
    %v454 = vld [vmem:[#allocation7 + $0x2b0] sm:$0xff]
    %v455 = vld [vmem:[#allocation7 + $0x2b8] sm:$0xff]
    %v456 = vld [vmem:[#allocation7 + $0x2c0] sm:$0xff]
    %v457 = vld [vmem:[#allocation7 + $0x2c8] sm:$0xff]
    %v458 = vld [vmem:[#allocation7 + $0x2d0] sm:$0xff]
    %v459 = vld [vmem:[#allocation7 + $0x2d8] sm:$0xff]
    %v460 = vld [vmem:[#allocation7 + $0x2e0] sm:$0xff]
    %v461 = vld [vmem:[#allocation7 + $0x2e8] sm:$0xff]
    %v462 = vld [vmem:[#allocation7 + $0x2f0] sm:$0xff]
    %v463 = vld [vmem:[#allocation7 + $0x2f8] sm:$0xff]
    %v464 = vld [vmem:[#allocation7 + $0x300] sm:$0xff]
    %v465 = vld [vmem:[#allocation7 + $0x308] sm:$0xff]
    %v466 = vld [vmem:[#allocation7 + $0x310] sm:$0xff]
    %v467 = vld [vmem:[#allocation7 + $0x318] sm:$0xff]
    %v468 = vld [vmem:[#allocation7 + $0x320] sm:$0xff]
    %v469 = vld [vmem:[#allocation7 + $0x328] sm:$0xff]
    %v470 = vld [vmem:[#allocation7 + $0x330] sm:$0xff]
    %v471 = vld [vmem:[#allocation7 + $0x338] sm:$0xff]
    %v472 = vld [vmem:[#allocation7 + $0x340] sm:$0xff]
    %v473 = vld [vmem:[#allocation7 + $0x348] sm:$0xff]
    %v474 = vld [vmem:[#allocation7 + $0x350] sm:$0xff]
    %v475 = vld [vmem:[#allocation7 + $0x358] sm:$0xff]
    %v476 = vld [vmem:[#allocation7 + $0x360] sm:$0xff]
    %v477 = vld [vmem:[#allocation7 + $0x368] sm:$0xff]
    %v478 = vld [vmem:[#allocation7 + $0x370] sm:$0xff]
    %v479 = vld [vmem:[#allocation7 + $0x378] sm:$0xff]
    %v480 = vld [vmem:[#allocation7 + $0x380] sm:$0xff]
    %v481 = vld [vmem:[#allocation7 + $0x388] sm:$0xff]
    %v482 = vld [vmem:[#allocation7 + $0x390] sm:$0xff]
    %v483 = vld [vmem:[#allocation7 + $0x398] sm:$0xff]
    %v484 = vld [vmem:[#allocation7 + $0x3a0] sm:$0xff]
    %v485 = vld [vmem:[#allocation7 + $0x3a8] sm:$0xff]
    %v486 = vld [vmem:[#allocation7 + $0x3b0] sm:$0xff]
    %v487 = vld [vmem:[#allocation7 + $0x3b8] sm:$0xff]
    %v488 = vld [vmem:[#allocation7 + $0x3c0] sm:$0xff]
    %v489 = vld [vmem:[#allocation7 + $0x3c8] sm:$0xff]
    %v490 = vld [vmem:[#allocation7 + $0x3d0] sm:$0xff]
    %v491 = vld [vmem:[#allocation7 + $0x3d8] sm:$0xff]
    %v492 = vld [vmem:[#allocation7 + $0x3e0] sm:$0xff]
    %v493 = vld [vmem:[#allocation7 + $0x3e8] sm:$0xff]
    %v494 = vld [vmem:[#allocation7 + $0x3f0] sm:$0xff]
    %v495 = vld [vmem:[#allocation7 + $0x3f8] sm:$0xff]
    %v496 = vld [vmem:[%s4] sm:$0x3]
    %v498 = vlaneseq
    %v499 = vshrl.u32 %v498, 7
    %v500 = vsub.s32 0, %v499
    %v501 = vrot.slane %v496, %v500
    %v502 = vlaneseq
    %v503 = vshrl.u32 %v502, 7
    %v504 = vsub.s32 1, %v503
    %v505 = vrot.slane %v496, %v504
    %508 = vmatprep.subr.mxu0 %v369
    %509 = vmatpush1.msra.mxu0 %v368
    %510 = vmatprep.subr.mxu0 %v371
    %511 = vmatpush1.msra.mxu0 %v370
    %512 = vmatprep.subr.mxu0 %v373
    %513 = vmatpush1.msra.mxu0 %v372
    %514 = vmatprep.subr.mxu0 %v375
    %515 = vmatpush1.msra.mxu0 %v374
    %516 = vmatprep.subr.mxu0 %v377
    %517 = vmatpush1.msra.mxu0 %v376
    %518 = vmatprep.subr.mxu0 %v379
    %519 = vmatpush1.msra.mxu0 %v378
    %520 = vmatprep.subr.mxu0 %v381
    %521 = vmatpush1.msra.mxu0 %v380
    %522 = vmatprep.subr.mxu0 %v383
    %523 = vmatpush1.msra.mxu0 %v382
    %524 = vmatprep.subr.mxu0 %v385
    %525 = vmatpush1.msra.mxu0 %v384
    %526 = vmatprep.subr.mxu0 %v387
    %527 = vmatpush1.msra.mxu0 %v386
    %528 = vmatprep.subr.mxu0 %v389
    %529 = vmatpush1.msra.mxu0 %v388
    %530 = vmatprep.subr.mxu0 %v391
    %531 = vmatpush1.msra.mxu0 %v390
    %532 = vmatprep.subr.mxu0 %v393
    %533 = vmatpush1.msra.mxu0 %v392
    %534 = vmatprep.subr.mxu0 %v395
    %535 = vmatpush1.msra.mxu0 %v394
    %536 = vmatprep.subr.mxu0 %v397
    %537 = vmatpush1.msra.mxu0 %v396
    %538 = vmatprep.subr.mxu0 %v399
    %539 = vmatpush1.msra.mxu0 %v398
    %540 = vmatprep.subr.mxu0 %v401
    %541 = vmatpush1.msra.mxu0 %v400
    %542 = vmatprep.subr.mxu0 %v403
    %543 = vmatpush1.msra.mxu0 %v402
    %544 = vmatprep.subr.mxu0 %v405
    %545 = vmatpush1.msra.mxu0 %v404
    %546 = vmatprep.subr.mxu0 %v407
    %547 = vmatpush1.msra.mxu0 %v406
    %548 = vmatprep.subr.mxu0 %v409
    %549 = vmatpush1.msra.mxu0 %v408
    %550 = vmatprep.subr.mxu0 %v411
    %551 = vmatpush1.msra.mxu0 %v410
    %552 = vmatprep.subr.mxu0 %v413
    %553 = vmatpush1.msra.mxu0 %v412
    %554 = vmatprep.subr.mxu0 %v415
    %555 = vmatpush1.msra.mxu0 %v414
    %556 = vmatprep.subr.mxu0 %v417
    %557 = vmatpush1.msra.mxu0 %v416
    %558 = vmatprep.subr.mxu0 %v419
    %559 = vmatpush1.msra.mxu0 %v418
    %560 = vmatprep.subr.mxu0 %v421
    %561 = vmatpush1.msra.mxu0 %v420
    %562 = vmatprep.subr.mxu0 %v423
    %563 = vmatpush1.msra.mxu0 %v422
    %564 = vmatprep.subr.mxu0 %v425
    %565 = vmatpush1.msra.mxu0 %v424
    %566 = vmatprep.subr.mxu0 %v427
    %567 = vmatpush1.msra.mxu0 %v426
    %568 = vmatprep.subr.mxu0 %v429
    %569 = vmatpush1.msra.mxu0 %v428
    %570 = vmatprep.subr.mxu0 %v431
    %571 = vmatpush1.msra.mxu0 %v430
    %572 = vmatprep.mubr.f32.mxu0 %v365
    %573 = vmatmul.mubr.f32.gmra.mrb[0].mxu0 %v364
    %v574 = vpop.f32.mrb[0].mxu0
    %v575 = vadd.f32 %v501, %v574
    %v576 = vpop.f32.mrb[0].mxu0
    %v577 = vadd.f32 %v505, %v576
    %578 = vdwg.mxu0
    %579 = vmatprep.subr.mxu0 %v433
    %580 = vmatpush1.msra.mxu0 %v432
    %581 = vmatprep.subr.mxu0 %v435
    %582 = vmatpush1.msra.mxu0 %v434
    %583 = vmatprep.subr.mxu0 %v437
    %584 = vmatpush1.msra.mxu0 %v436
    %585 = vmatprep.subr.mxu0 %v439
    %586 = vmatpush1.msra.mxu0 %v438
    %587 = vmatprep.subr.mxu0 %v441
    %588 = vmatpush1.msra.mxu0 %v440
    %589 = vmatprep.subr.mxu0 %v443
    %590 = vmatpush1.msra.mxu0 %v442
    %591 = vmatprep.subr.mxu0 %v445
    %592 = vmatpush1.msra.mxu0 %v444
    %593 = vmatprep.subr.mxu0 %v447
    %594 = vmatpush1.msra.mxu0 %v446
    %595 = vmatprep.subr.mxu0 %v449
    %596 = vmatpush1.msra.mxu0 %v448
    %597 = vmatprep.subr.mxu0 %v451
    %598 = vmatpush1.msra.mxu0 %v450
    %599 = vmatprep.subr.mxu0 %v453
    %600 = vmatpush1.msra.mxu0 %v452
    %601 = vmatprep.subr.mxu0 %v455
    %602 = vmatpush1.msra.mxu0 %v454
    %603 = vmatprep.subr.mxu0 %v457
    %604 = vmatpush1.msra.mxu0 %v456
    %605 = vmatprep.subr.mxu0 %v459
    %606 = vmatpush1.msra.mxu0 %v458
    %607 = vmatprep.subr.mxu0 %v461
    %608 = vmatpush1.msra.mxu0 %v460
    %609 = vmatprep.subr.mxu0 %v463
    %610 = vmatpush1.msra.mxu0 %v462
    %611 = vmatprep.subr.mxu0 %v465
    %612 = vmatpush1.msra.mxu0 %v464
    %613 = vmatprep.subr.mxu0 %v467
    %614 = vmatpush1.msra.mxu0 %v466
    %615 = vmatprep.subr.mxu0 %v469
    %616 = vmatpush1.msra.mxu0 %v468
    %617 = vmatprep.subr.mxu0 %v471
    %618 = vmatpush1.msra.mxu0 %v470
    %619 = vmatprep.subr.mxu0 %v473
    %620 = vmatpush1.msra.mxu0 %v472
    %621 = vmatprep.subr.mxu0 %v475
    %622 = vmatpush1.msra.mxu0 %v474
    %623 = vmatprep.subr.mxu0 %v477
    %624 = vmatpush1.msra.mxu0 %v476
    %625 = vmatprep.subr.mxu0 %v479
    %626 = vmatpush1.msra.mxu0 %v478
    %627 = vmatprep.subr.mxu0 %v481
    %628 = vmatpush1.msra.mxu0 %v480
    %629 = vmatprep.subr.mxu0 %v483
    %630 = vmatpush1.msra.mxu0 %v482
    %631 = vmatprep.subr.mxu0 %v485
    %632 = vmatpush1.msra.mxu0 %v484
    %633 = vmatprep.subr.mxu0 %v487
    %634 = vmatpush1.msra.mxu0 %v486
    %635 = vmatprep.subr.mxu0 %v489
    %636 = vmatpush1.msra.mxu0 %v488
    %637 = vmatprep.subr.mxu0 %v491
    %638 = vmatpush1.msra.mxu0 %v490
    %639 = vmatprep.subr.mxu0 %v493
    %640 = vmatpush1.msra.mxu0 %v492
    %641 = vmatprep.subr.mxu0 %v495
    %642 = vmatpush1.msra.mxu0 %v494
    %643 = vmatprep.mubr.f32.mxu0 %v367
    %644 = vmatmul.mubr.f32.gmra.mrb[0].mxu0 %v366
    %v645 = vpop.f32.mrb[0].mxu0
    %v646 = vadd.f32 %v575, %v645
    %v647 = vpop.f32.mrb[0].mxu0
    %v648 = vadd.f32 %v577, %v647
    %649 = vdwg.mxu0
    %v650 = vadd.f32 %v646, %v218
    %v651 = vadd.f32 %v648, %v219
    %v654 = vcombine.low %v650, %v651
    %v656 = vunpack.c.l.s4 1983009808
    %v657 = vunpack.c.0.s8 %v656
    %v658 = vlaneseq
    %v659 = vshrl.u32 %v658, 7
    %v660 = vsub.s32 %v657, %v659
    %v661 = vrot.slane %v654, %v660
    %663 = vst [vmem:[#allocation8] sm:$0xf] %v661
    // Predicated region
    $region34: #{tpu_custom_call.1} parent=1 // pred_check
      _
    $region35: #{tpu_custom_call.1} parent=1 // pred_check_branch
      %665 = sbr.rel (0) target = $region37
    $region36: #{tpu_custom_call.1} parent=1 // pred_region
      %s667 = ssub.s32 64, 64
      %668 = vsyncadd [#allocation4], %s667
      %s670 = sshll.u32 [#allocation8], 4
      %s671 = int_to_ptr.vmem [resolvable:$true] %s670
      %673 = dma.vmem_to_hbm [thread:$0]  %s671, 64, %s5, [#allocation4]
    $region37: #{tpu_custom_call.1} parent=1 // pred_fallthru
      _
    // Predicated region
    $region38: #{tpu_custom_call.1} parent=1 // pred_check
      _
    $region39: #{tpu_custom_call.1} parent=1 // pred_check_branch
      %675 = sbr.rel (0) target = $region41
    $region40: #{tpu_custom_call.1} parent=1 // pred_region
      %676 = dma.done [#allocation4], 64
    $region41: #{tpu_custom_call.1} parent=1 // pred_fallthru
      _
    %677 = vsyncpa [#allocation3], 1
    %678 = vsyncpa [#allocation6], 1
    %679 = vsyncpa [#allocation4], 1

</llo_original>
